<compile_context>
chip_gen: v7x
topology: tpu7x:2x2x1
jax: 0.10.0
libtpu: 0.0.40
codegen_flags: <defaults>
</compile_context>

<pallas_src>
import functools

import jax
import jax.numpy as jnp
from jax import lax
from jax.experimental import pallas as pl
from jax.experimental.pallas import tpu as pltpu

LANE = 128
SUBLANE = 8


def bundler_kernel(h_ref, c_ref, wh_ref, wc_ref, b_ref, o_ref):
    # Fused concat + linear on the MXU: [h | c] @ [Wh ; Wc] == h@Wh + c@Wc,
    # so no explicit concat is materialized in VMEM.
    z = jnp.dot(h_ref[...], wh_ref[...], preferred_element_type=jnp.float32)
    z = z + jnp.dot(c_ref[...], wc_ref[...], preferred_element_type=jnp.float32)
    z = z + b_ref[...]  # (1, out_pad) broadcasts over rows

    # Row-wise L2 normalize (F.normalize p=2 dim=1, eps=1e-12).
    # rsqrt lowers to the EUP (its own VLIW slot) instead of sqrt + vector
    # divide on the VALU. max(ss, 1e-24) == (max(sqrt(ss), 1e-12))**2, so the
    # clamp intent is preserved. Padded lane columns are exactly zero and do
    # not perturb the norm.
    sumsq = jnp.sum(z * z, axis=1, keepdims=True)
    inv = lax.rsqrt(jnp.maximum(sumsq, 1e-24))
    z = z * inv

    # Activation (ReLU).
    # Note: when N % tm != 0, padded tail rows may normalize garbage (possibly
    # NaN); they are discarded at the output block boundary, so valid rows are
    # unaffected.
    o_ref[...] = jnp.maximum(z, 0.0).astype(o_ref.dtype)


def prepare_bundler_params(w, b, in_feats):
    """One-time (init-time) parameter prep, hoisted out of the per-call path.

    w: (out_feats, 2*in_feats)  -- PyTorch nn.Linear layout
    b: (out_feats,)
    Returns (w_h, w_c, b2) with shapes (in, out_pad), (in, out_pad), (1, out_pad),
    where out_pad rounds out_feats up to a multiple of 128 so every kernel
    output store is lane-dense (unmasked vst). Padded columns are zero.
    """
    out_feats = w.shape[0]
    out_pad = ((out_feats + LANE - 1) // LANE) * LANE
    w_h = jnp.transpose(w[:, :in_feats])   # (in_feats, out_feats)
    w_c = jnp.transpose(w[:, in_feats:])   # (in_feats, out_feats)
    pad = out_pad - out_feats
    if pad:
        w_h = jnp.pad(w_h, ((0, 0), (0, pad)))
        w_c = jnp.pad(w_c, ((0, 0), (0, pad)))
        b = jnp.pad(b, (0, pad))
    return w_h, w_c, b.reshape(1, out_pad)


def _choose_tile(n_rows, in_feats, out_pad, tm_request, itemsize=4,
                 vmem_budget=40 * 1024 * 1024):
    """Pick the row tile: as large as requested, but
      (a) clamped so the grid has >= 2 steps (v7x's two TensorCores both work),
      (b) fitting a conservative VMEM budget (safe on v7x's 64 MiB VMEM).
    Returns (tm, vmem_limit_bytes)."""
    def round_up(x, m):
        return ((x + m - 1) // m) * m

    tm = min(tm_request, round_up(pl.cdiv(n_rows, 2), SUBLANE))
    tm = max(SUBLANE, round_up(tm, SUBLANE))

    def vmem_bytes(t):
        # Double-buffered h/c/out row tiles + (double-buffer-allocated, but
        # never re-DMA'd since their block index is constant) Wh, Wc, bias.
        tiles = 2 * (2 * t * in_feats + t * out_pad) * itemsize
        weights = 2 * (2 * in_feats * out_pad + out_pad) * itemsize
        return tiles + weights

    while tm > SUBLANE and vmem_bytes(tm) > vmem_budget:
        tm = max(SUBLANE, round_up(tm // 2, SUBLANE))

    limit = int(vmem_bytes(tm) * 1.25) + (4 << 20)
    limit = min(max(limit, 16 << 20), 60 << 20)
    return tm, limit


@functools.partial(jax.jit, static_argnames=("out_feats", "tm"))
def bundler_forward(h, c, w_h, w_c, b2, *, out_feats, tm=512):
    """h, c: (N, in_feats); w_h/w_c: (in_feats, out_pad); b2: (1, out_pad)."""
    n, in_feats = h.shape
    out_pad = w_h.shape[1]
    tm_eff, vmem_limit = _choose_tile(n, in_feats, out_pad, tm)
    grid = (pl.cdiv(n, tm_eff),)

    out = pl.pallas_call(
        bundler_kernel,
        out_shape=jax.ShapeDtypeStruct((n, out_pad), h.dtype),
        grid_spec=pltpu.PrefetchScalarGridSpec(
            num_scalar_prefetch=0,
            grid=grid,
            in_specs=[
                pl.BlockSpec((tm_eff, in_feats), lambda i: (i, 0)),    # h row-tile
                pl.BlockSpec((tm_eff, in_feats), lambda i: (i, 0)),    # c row-tile
                pl.BlockSpec((in_feats, out_pad), lambda i: (0, 0)),   # W_h (resident)
                pl.BlockSpec((in_feats, out_pad), lambda i: (0, 0)),   # W_c (resident)
                pl.BlockSpec((1, out_pad), lambda i: (0, 0)),          # bias
            ],
            out_specs=pl.BlockSpec((tm_eff, out_pad), lambda i: (i, 0)),
        ),
        compiler_params=pltpu.CompilerParams(
            dimension_semantics=("parallel",),
            vmem_limit_bytes=vmem_limit,
        ),
    )(h, c, w_h, w_c, b2)

    # Drop lane-padding columns (their weights/bias are zero -> outputs are 0).
    if out_pad != out_feats:
        out = out[:, :out_feats]
    return out


def bundler_reference(h, c, w, b):
    bundle = jnp.concatenate([h, c], axis=1) @ w.T + b
    norm = jnp.sqrt(jnp.sum(bundle * bundle, axis=1, keepdims=True))
    bundle = bundle / jnp.maximum(norm, 1e-12)
    return jnp.maximum(bundle, 0.0)


if __name__ == "__main__":
    # Small shapes consistent with the module: N nodes, in_feats, out_feats.
    N, in_feats, out_feats = 128, 32, 64

    key = jax.random.PRNGKey(0)
    k_h, k_c, k_w, k_b = jax.random.split(key, 4)

    h = jax.random.normal(k_h, (N, in_feats), dtype=jnp.float32)
    c = jax.random.normal(k_c, (N, in_feats), dtype=jnp.float32)

    # Deterministic parameter init mimicking the module's __init__:
    #   xavier_uniform_(weight, gain=calculate_gain('relu')=sqrt(2))
    fan_in, fan_out = 2 * in_feats, out_feats
    gain = jnp.sqrt(2.0)
    limit = gain * jnp.sqrt(6.0 / (fan_in + fan_out))
    w = jax.random.uniform(
        k_w, (out_feats, 2 * in_feats), dtype=jnp.float32, minval=-limit, maxval=limit
    )
    # nn.Linear default bias init: U(-1/sqrt(fan_in), 1/sqrt(fan_in))
    b_limit = 1.0 / jnp.sqrt(fan_in)
    b = jax.random.uniform(
        k_b, (out_feats,), dtype=jnp.float32, minval=-b_limit, maxval=b_limit
    )

    # One-time parameter prep (weight split/transpose + lane padding).
    w_h, w_c, b2 = prepare_bundler_params(w, b, in_feats)

    out = bundler_forward(h, c, w_h, w_c, b2, out_feats=out_feats)
    out = jax.block_until_ready(out)

    ref = bundler_reference(h, c, w, b)
    assert out.shape == (N, out_feats)
    assert jnp.allclose(out, ref, atol=1e-5, rtol=1e-5), "mismatch vs reference"

    print("KERNEL_OK")
</pallas_src>

<mosaic_0001>
module attributes {stable_mosaic.version = 11 : i64} {
  func.func @bundler_kernel(%arg0: i32, %arg1: memref<64x32xf32, #tpu.memory_space<vmem>>, %arg2: memref<64x32xf32, #tpu.memory_space<vmem>>, %arg3: memref<32x128xf32, #tpu.memory_space<vmem>>, %arg4: memref<32x128xf32, #tpu.memory_space<vmem>>, %arg5: memref<1x128xf32, #tpu.memory_space<vmem>>, %arg6: memref<64x128xf32, #tpu.memory_space<vmem>>) attributes {dimension_semantics = [#tpu.dimension_semantics<parallel>], iteration_bounds = array<i64: 2>, scalar_prefetch = 0 : i64, scratch_operands = 0 : i64, tpu.core_type = #tpu.core_type<tc>, window_params = [{transform_indices = @transform_0, window_bounds = array<i64: 64, 32>}, {transform_indices = @transform_1, window_bounds = array<i64: 64, 32>}, {pipeline_mode = #tpu.pipeline_mode<synchronous>, transform_indices = @transform_2, window_bounds = array<i64: 32, 128>}, {pipeline_mode = #tpu.pipeline_mode<synchronous>, transform_indices = @transform_3, window_bounds = array<i64: 32, 128>}, {pipeline_mode = #tpu.pipeline_mode<synchronous>, transform_indices = @transform_4, window_bounds = array<i64: 1, 128>}, {transform_indices = @transform_5, window_bounds = array<i64: 64, 128>}]} {
    %c0 = arith.constant 0 : index
    %c0_0 = arith.constant 0 : index
    %0 = vector.load %arg1[%c0, %c0_0] : memref<64x32xf32, #tpu.memory_space<vmem>>, vector<64x32xf32>
    %c0_1 = arith.constant 0 : index
    %c0_2 = arith.constant 0 : index
    %1 = vector.load %arg3[%c0_1, %c0_2] : memref<32x128xf32, #tpu.memory_space<vmem>>, vector<32x128xf32>
    %cst = arith.constant dense<0.000000e+00> : vector<64x128xf32>
    %2 = tpu.matmul %0, %1, %cst {dimension_numbers = #tpu.dot_dimension_numbers<[1], [0], [0], [1], [0, 0, 1, 1], [], []>} : vector<64x32xf32>, vector<32x128xf32>, vector<64x128xf32> -> vector<64x128xf32>
    %c0_3 = arith.constant 0 : index
    %c0_4 = arith.constant 0 : index
    %3 = vector.load %arg2[%c0_3, %c0_4] : memref<64x32xf32, #tpu.memory_space<vmem>>, vector<64x32xf32>
    %c0_5 = arith.constant 0 : index
    %c0_6 = arith.constant 0 : index
    %4 = vector.load %arg4[%c0_5, %c0_6] : memref<32x128xf32, #tpu.memory_space<vmem>>, vector<32x128xf32>
    %cst_7 = arith.constant dense<0.000000e+00> : vector<64x128xf32>
    %5 = tpu.matmul %3, %4, %cst_7 {dimension_numbers = #tpu.dot_dimension_numbers<[1], [0], [0], [1], [0, 0, 1, 1], [], []>} : vector<64x32xf32>, vector<32x128xf32>, vector<64x128xf32> -> vector<64x128xf32>
    %6 = arith.addf %2, %5 : vector<64x128xf32>
    %c0_8 = arith.constant 0 : index
    %c0_9 = arith.constant 0 : index
    %7 = vector.load %arg5[%c0_8, %c0_9] : memref<1x128xf32, #tpu.memory_space<vmem>>, vector<1x128xf32>
    %8 = vector.broadcast %7 : vector<1x128xf32> to vector<64x128xf32>
    %9 = arith.addf %6, %8 : vector<64x128xf32>
    %10 = arith.mulf %9, %9 : vector<64x128xf32>
    %cst_10 = arith.constant dense<0.000000e+00> : vector<64xf32>
    %11 = vector.multi_reduction <add>, %10, %cst_10 [1] : vector<64x128xf32> to vector<64xf32>
    %12 = vector.shape_cast %11 : vector<64xf32> to vector<64x1xf32>
    %cst_11 = arith.constant 1.000000e-24 : f32
    %13 = vector.broadcast %cst_11 : f32 to vector<64x1xf32>
    %14 = arith.maximumf %12, %13 : vector<64x1xf32>
    %15 = math.rsqrt %14 : vector<64x1xf32>
    %16 = vector.broadcast %15 : vector<64x1xf32> to vector<64x128xf32>
    %17 = arith.mulf %9, %16 : vector<64x128xf32>
    %cst_12 = arith.constant 0.000000e+00 : f32
    %18 = vector.broadcast %cst_12 : f32 to vector<64x128xf32>
    %19 = arith.maximumf %17, %18 : vector<64x128xf32>
    %c0_13 = arith.constant 0 : index
    %c0_14 = arith.constant 0 : index
    %20 = vector.load %arg6[%c0_13, %c0_14] : memref<64x128xf32, #tpu.memory_space<vmem>>, vector<64x128xf32>
    tpu.vector_store %arg6[%c0_13, %c0_14], %19 {strides = array<i32>} : memref<64x128xf32, #tpu.memory_space<vmem>>, vector<64x128xf32>,
    return
  }
  func.func @transform_0(%arg0: i32) -> (i32, i32) {
    %c0_i32 = arith.constant 0 : i32
    %c0_i32_0 = arith.constant 0 : i32
    return %arg0, %c0_i32 : i32, i32
  }
  func.func @transform_1(%arg0: i32) -> (i32, i32) {
    %c0_i32 = arith.constant 0 : i32
    %c0_i32_0 = arith.constant 0 : i32
    return %arg0, %c0_i32 : i32, i32
  }
  func.func @transform_2(%arg0: i32) -> (i32, i32) {
    %c0_i32 = arith.constant 0 : i32
    %c0_i32_0 = arith.constant 0 : i32
    %c0_i32_1 = arith.constant 0 : i32
    return %c0_i32, %c0_i32_0 : i32, i32
  }
  func.func @transform_3(%arg0: i32) -> (i32, i32) {
    %c0_i32 = arith.constant 0 : i32
    %c0_i32_0 = arith.constant 0 : i32
    %c0_i32_1 = arith.constant 0 : i32
    return %c0_i32, %c0_i32_0 : i32, i32
  }
  func.func @transform_4(%arg0: i32) -> (i32, i32) {
    %c0_i32 = arith.constant 0 : i32
    %c0_i32_0 = arith.constant 0 : i32
    %c0_i32_1 = arith.constant 0 : i32
    return %c0_i32, %c0_i32_0 : i32, i32
  }
  func.func @transform_5(%arg0: i32) -> (i32, i32) {
    %c0_i32 = arith.constant 0 : i32
    %c0_i32_0 = arith.constant 0 : i32
    return %arg0, %c0_i32 : i32, i32
  }
}

</mosaic_0001>

<llo_original>
// kernel: bundler_forward.1
$region0: #{bundler_forward.1}
  #allocation0 [shape = 'u32[]', space=smem, size = 0x4, offset = 0x4, fixed_abs, tag = 'smem constant byte address 0x4 - core index']
  #allocation1 [shape = 'u32[144,128]{1,0:T(1,128)}', space=vmem, size = 0x12000, scoped, tag = 'internal scratch']
  %s0 = inlined_call_operand.vmem [shape: f32[128,32], index: 0, kind: input, shape index: {}]
  %s1 = inlined_call_operand.vmem [shape: f32[128,32], index: 1, kind: input, shape index: {}]
  %s2 = inlined_call_operand.vmem [shape: f32[32,128], index: 2, kind: input, shape index: {}]
  %s3 = inlined_call_operand.vmem [shape: f32[32,128], index: 3, kind: input, shape index: {}]
  %s4 = inlined_call_operand.vmem [shape: f32[1,128], index: 4, kind: input, shape index: {}]
  %s5 = inlined_call_operand.vmem [shape: f32[128,128], index: 5, kind: output, shape index: {}]
  %s6 = sld [smem:[#allocation0]]
  $region53: #{bundler_forward.1} parent=0
    _
  %s8 = ssub.s32 1, %s6
  %s9 = scalar_select 0, %s8, %s6
  loop: start=0, step=1, limit=4
  $region2: #{bundler_forward.1} parent=0 // loop_pre_header
    _
  $region3: #{bundler_forward.1} parent=0 // loop_header
    %s11 = sphi 0, %s15
    %p12 = scmp.ge.s32.totalorder %s11, 4
    %s21 = sphi 0, %s23
    %s24 = sphi 0, %s21
    %s25 = sphi 0, %s24
    %s41 = sphi 0, %s25
    %s47 = sphi 0, %s49
    %s50 = sphi 0, %s47
    %s51 = sphi 0, %s50
    %s67 = sphi 0, %s51
    %s71 = sphi 0, %s71
    %s73 = sphi 0, %s71
    %s74 = sphi 0, %s73
    %s88 = sphi 0, %s74
    %s92 = sphi 0, %s92
    %s94 = sphi 0, %s92
    %s95 = sphi 0, %s94
    %s109 = sphi 0, %s95
    %s113 = sphi 0, %s113
    %s115 = sphi 0, %s113
    %s116 = sphi 0, %s115
    %s130 = sphi 0, %s116
    %s136 = sphi 0, %s138
    %s139 = sphi 0, %s136
    %s140 = sphi 0, %s139
    %s156 = sphi 0, %s140
  $region4: #{bundler_forward.1} parent=0 // loop_header_branch
    %14 = sbr.rel (%p12) target = $region8
  $region5: #{bundler_forward.1} parent=0 // loop_body
    %s16 = ssub.s32 %s11, 1
    %s17 = ssub.s32 %s11, 2
    %s18 = sadd.s32 %s11, 1
    %s19 = ssub.s32 %s11, %s18
    %p20 = scmp.eq.s32.totalorder %s19, 0
    %s22 = sadd.s32 %s21, 1
    %s23 = scalar_select %p20, %s21, %s22
    %p26 = pneg %p20
    %p27 = scmp.eq.s32.totalorder %s11, 1
    %p28 = por %p26, %p27
    %p29 = scmp.ne.s32.totalorder %s21, %s24
    %p30 = scmp.eq.s32.totalorder %s11, 0
    %p31 = por %p29, %p30
    %p32 = scmp.ne.s32.totalorder %s21, %s24
    %p33 = scmp.eq.s32.totalorder %s16, 1
    %p34 = por %p32, %p33
    %p35 = scmp.ne.s32.totalorder %s24, %s25
    %p36 = scmp.eq.s32.totalorder %s16, 0
    %p37 = por %p35, %p36
    %p38 = scmp.ne.s32.totalorder %s24, %s25
    %p39 = scmp.eq.s32.totalorder %s17, 1
    %p40 = por %p38, %p39
    %p42 = scmp.ne.s32.totalorder %s25, %s41
    %p43 = scmp.eq.s32.totalorder %s17, 0
    %p44 = por %p42, %p43
    %s45 = ssub.s32 %s11, %s18
    %p46 = scmp.eq.s32.totalorder %s45, 0
    %s48 = sadd.s32 %s47, 1
    %s49 = scalar_select %p46, %s47, %s48
    %p52 = pneg %p46
    %p53 = scmp.eq.s32.totalorder %s11, 1
    %p54 = por %p52, %p53
    %p55 = scmp.ne.s32.totalorder %s47, %s50
    %p56 = scmp.eq.s32.totalorder %s11, 0
    %p57 = por %p55, %p56
    %p58 = scmp.ne.s32.totalorder %s47, %s50
    %p59 = scmp.eq.s32.totalorder %s16, 1
    %p60 = por %p58, %p59
    %p61 = scmp.ne.s32.totalorder %s50, %s51
    %p62 = scmp.eq.s32.totalorder %s16, 0
    %p63 = por %p61, %p62
    %p64 = scmp.ne.s32.totalorder %s50, %s51
    %p65 = scmp.eq.s32.totalorder %s17, 1
    %p66 = por %p64, %p65
    %p68 = scmp.ne.s32.totalorder %s51, %s67
    %p69 = scmp.eq.s32.totalorder %s17, 0
    %p70 = por %p68, %p69
    %s72 = sadd.s32 %s71, 1
    %p75 = scmp.eq.s32.totalorder %s11, 1
    %p76 = scmp.ne.s32.totalorder %s71, %s73
    %p77 = scmp.eq.s32.totalorder %s11, 0
    %p78 = por %p76, %p77
    %p79 = scmp.ne.s32.totalorder %s71, %s73
    %p80 = scmp.eq.s32.totalorder %s16, 1
    %p81 = por %p79, %p80
    %p82 = scmp.ne.s32.totalorder %s73, %s74
    %p83 = scmp.eq.s32.totalorder %s16, 0
    %p84 = por %p82, %p83
    %p85 = scmp.ne.s32.totalorder %s73, %s74
    %p86 = scmp.eq.s32.totalorder %s17, 1
    %p87 = por %p85, %p86
    %p89 = scmp.ne.s32.totalorder %s74, %s88
    %p90 = scmp.eq.s32.totalorder %s17, 0
    %p91 = por %p89, %p90
    %s93 = sadd.s32 %s92, 1
    %p96 = scmp.eq.s32.totalorder %s11, 1
    %p97 = scmp.ne.s32.totalorder %s92, %s94
    %p98 = scmp.eq.s32.totalorder %s11, 0
    %p99 = por %p97, %p98
    %p100 = scmp.ne.s32.totalorder %s92, %s94
    %p101 = scmp.eq.s32.totalorder %s16, 1
    %p102 = por %p100, %p101
    %p103 = scmp.ne.s32.totalorder %s94, %s95
    %p104 = scmp.eq.s32.totalorder %s16, 0
    %p105 = por %p103, %p104
    %p106 = scmp.ne.s32.totalorder %s94, %s95
    %p107 = scmp.eq.s32.totalorder %s17, 1
    %p108 = por %p106, %p107
    %p110 = scmp.ne.s32.totalorder %s95, %s109
    %p111 = scmp.eq.s32.totalorder %s17, 0
    %p112 = por %p110, %p111
    %s114 = sadd.s32 %s113, 1
    %p117 = scmp.eq.s32.totalorder %s11, 1
    %p118 = scmp.ne.s32.totalorder %s113, %s115
    %p119 = scmp.eq.s32.totalorder %s11, 0
    %p120 = por %p118, %p119
    %p121 = scmp.ne.s32.totalorder %s113, %s115
    %p122 = scmp.eq.s32.totalorder %s16, 1
    %p123 = por %p121, %p122
    %p124 = scmp.ne.s32.totalorder %s115, %s116
    %p125 = scmp.eq.s32.totalorder %s16, 0
    %p126 = por %p124, %p125
    %p127 = scmp.ne.s32.totalorder %s115, %s116
    %p128 = scmp.eq.s32.totalorder %s17, 1
    %p129 = por %p127, %p128
    %p131 = scmp.ne.s32.totalorder %s116, %s130
    %p132 = scmp.eq.s32.totalorder %s17, 0
    %p133 = por %p131, %p132
    %s134 = ssub.s32 %s11, %s18
    %p135 = scmp.eq.s32.totalorder %s134, 0
    %s137 = sadd.s32 %s136, 1
    %s138 = scalar_select %p135, %s136, %s137
    %p141 = pneg %p135
    %p142 = scmp.eq.s32.totalorder %s11, 1
    %p143 = por %p141, %p142
    %p144 = scmp.ne.s32.totalorder %s136, %s139
    %p145 = scmp.eq.s32.totalorder %s11, 0
    %p146 = por %p144, %p145
    %p147 = scmp.ne.s32.totalorder %s136, %s139
    %p148 = scmp.eq.s32.totalorder %s16, 1
    %p149 = por %p147, %p148
    %p150 = scmp.ne.s32.totalorder %s139, %s140
    %p151 = scmp.eq.s32.totalorder %s16, 0
    %p152 = por %p150, %p151
    %p153 = scmp.ne.s32.totalorder %s139, %s140
    %p154 = scmp.eq.s32.totalorder %s17, 1
    %p155 = por %p153, %p154
    %p157 = scmp.ne.s32.totalorder %s140, %s156
    %p158 = scmp.eq.s32.totalorder %s17, 0
    %p159 = por %p157, %p158
    %p160 = scmp.le.s32.totalorder 1, %s11
    %p161 = scmp.lt.s32.totalorder %s11, 3
    %p162 = pnand %p160, %p161
    %p163 = pneg %p162
    // Predicated region
    $region9: #{bundler_forward.1} parent=5 // pred_check
      _
    $region10: #{bundler_forward.1} parent=5 // pred_check_branch
      %165 = sbr.rel (%p162) target = $region12
    $region11: #{bundler_forward.1} parent=5 // pred_region
      %s166 = ssub.s32 %s11, 1
      // Predicated region
      $region13: #{bundler_forward.1} parent=11 // pred_check
        %p167 = pneg %p84
      $region14: #{bundler_forward.1} parent=11 // pred_check_branch
        %169 = sbr.rel (%p167) target = $region16
      $region15: #{bundler_forward.1} parent=11 // pred_region
        _
      $region16: #{bundler_forward.1} parent=11 // pred_fallthru
        _
      // Predicated region
      $region17: #{bundler_forward.1} parent=11 // pred_check
        %p170 = pneg %p105
      $region18: #{bundler_forward.1} parent=11 // pred_check_branch
        %172 = sbr.rel (%p170) target = $region20
      $region19: #{bundler_forward.1} parent=11 // pred_region
        _
      $region20: #{bundler_forward.1} parent=11 // pred_fallthru
        _
      // Predicated region
      $region21: #{bundler_forward.1} parent=11 // pred_check
        %p173 = pneg %p126
      $region22: #{bundler_forward.1} parent=11 // pred_check_branch
        %175 = sbr.rel (%p173) target = $region24
      $region23: #{bundler_forward.1} parent=11 // pred_region
        _
      $region24: #{bundler_forward.1} parent=11 // pred_fallthru
        _
    $region12: #{bundler_forward.1} parent=5 // pred_fallthru
      _
    %p176 = scmp.lt.s32.totalorder %s11, 2
    // Predicated region
    $region25: #{bundler_forward.1} parent=5 // pred_check
      %p177 = pneg %p176
    $region26: #{bundler_forward.1} parent=5 // pred_check_branch
      %179 = sbr.rel (%p177) target = $region28
    $region27: #{bundler_forward.1} parent=5 // pred_region
      // Predicated region
      $region29: #{bundler_forward.1} parent=27 // pred_check
        %p180 = pneg %p31
      $region30: #{bundler_forward.1} parent=27 // pred_check_branch
        %182 = sbr.rel (%p180) target = $region32
      $region31: #{bundler_forward.1} parent=27 // pred_region
        %s183 = smul.u32 8, %s11
        %p184 = scmp.lt.s32.totalorder %s183, 15
        %s185 = scalar_select %p184, %s183, 15
        %s186 = smul.addr %s185, 8
        %s187 = scalar_lea.vmem %s0, %s186
        %s188 = smul.u32 8, %s11
      $region32: #{bundler_forward.1} parent=27 // pred_fallthru
        _
      // Predicated region
      $region33: #{bundler_forward.1} parent=27 // pred_check
        %p189 = pneg %p57
      $region34: #{bundler_forward.1} parent=27 // pred_check_branch
        %191 = sbr.rel (%p189) target = $region36
      $region35: #{bundler_forward.1} parent=27 // pred_region
        %s192 = smul.u32 8, %s11
        %p193 = scmp.lt.s32.totalorder %s192, 15
        %s194 = scalar_select %p193, %s192, 15
        %s195 = smul.addr %s194, 8
        %s196 = scalar_lea.vmem %s1, %s195
        %s197 = smul.u32 8, %s11
      $region36: #{bundler_forward.1} parent=27 // pred_fallthru
        _
    $region28: #{bundler_forward.1} parent=5 // pred_fallthru
      _
    %p198 = scmp.le.s32.totalorder 1, %s11
    %p199 = scmp.lt.s32.totalorder %s11, 3
    %p200 = pnand %p198, %p199
    %p201 = pneg %p200
    // Predicated region
    $region37: #{bundler_forward.1} parent=5 // pred_check
      _
    $region38: #{bundler_forward.1} parent=5 // pred_check_branch
      %203 = sbr.rel (%p200) target = $region40
    $region39: #{bundler_forward.1} parent=5 // pred_region
      %s204 = ssub.s32 %s11, 1
      %s205 = smul.u32 8, %s16
      %p206 = scmp.lt.s32.totalorder %s205, 15
      %s207 = scalar_select %p206, %s205, 15
      %s208 = smul.addr %s207, 8
      %s209 = scalar_lea.vmem %s0, %s208
      %p210 = pneg %p37
      %p211 = pneg %p34
      %s212 = smul.u32 8, %s16
      %p213 = scmp.lt.s32.totalorder %s212, 15
      %s214 = scalar_select %p213, %s212, 15
      %s215 = smul.addr %s214, 8
      %s216 = scalar_lea.vmem %s1, %s215
      %p217 = pneg %p63
      %p218 = pneg %p60
      %p219 = pneg %p84
      %p220 = pneg %p81
      %p221 = pneg %p105
      %p222 = pneg %p102
      %p223 = pneg %p126
      %p224 = pneg %p123
      %p225 = pneg %p152
      %p226 = pneg %p149
      %s227 = smul.u32 8, %s16
      %p228 = scmp.lt.s32.totalorder %s227, 15
      %s229 = scalar_select %p228, %s227, 15
      %s230 = smul.addr %s229, 8
      %s231 = scalar_lea.vmem %s5, %s230
      %s232 = smul.u32 8, %s16
      %p233 = scmp.lt.s32.totalorder %s232, 15
      %s234 = scalar_select %p233, %s232, 15
      %s235 = smul.addr %s234, 8
      %s236 = scalar_lea.vmem %s0, %s235
      %s237 = smul.u32 8, %s16
      %s238 = smul.u32 8, %s16
      %p239 = scmp.lt.s32.totalorder %s238, 15
      %s240 = scalar_select %p239, %s238, 15
      %s241 = smul.addr %s240, 8
      %s242 = scalar_lea.vmem %s1, %s241
      %s243 = smul.u32 8, %s16
      %s244 = smul.u32 8, %s16
      %p245 = scmp.lt.s32.totalorder %s244, 15
      %s246 = scalar_select %p245, %s244, 15
      %s247 = smul.addr %s246, 8
      %s248 = scalar_lea.vmem %s5, %s247
      %s249 = smul.u32 8, %s16
      %v250 = vld [vmem:[%s236] sm:$0xff]
      %v251 = vld [vmem:[%s236 + $0x8] sm:$0xff]
      %v252 = vld [vmem:[%s236 + $0x10] sm:$0xff]
      %v253 = vld [vmem:[%s236 + $0x18] sm:$0xff]
      %v254 = vld [vmem:[%s236 + $0x20] sm:$0xff]
      %v255 = vld [vmem:[%s236 + $0x28] sm:$0xff]
      %v256 = vld [vmem:[%s236 + $0x30] sm:$0xff]
      %v257 = vld [vmem:[%s236 + $0x38] sm:$0xff]
      %v258 = vld [vmem:[%s2] sm:$0xff]
      %v259 = vld [vmem:[%s2 + $0x8] sm:$0xff]
      %v260 = vld [vmem:[%s2 + $0x10] sm:$0xff]
      %v261 = vld [vmem:[%s2 + $0x18] sm:$0xff]
      %v262 = vld [vmem:[%s242] sm:$0xff]
      %v263 = vld [vmem:[%s242 + $0x8] sm:$0xff]
      %v264 = vld [vmem:[%s242 + $0x10] sm:$0xff]
      %v265 = vld [vmem:[%s242 + $0x18] sm:$0xff]
      %v266 = vld [vmem:[%s242 + $0x20] sm:$0xff]
      %v267 = vld [vmem:[%s242 + $0x28] sm:$0xff]
      %v268 = vld [vmem:[%s242 + $0x30] sm:$0xff]
      %v269 = vld [vmem:[%s242 + $0x38] sm:$0xff]
      %v270 = vld [vmem:[%s3] sm:$0xff]
      %v271 = vld [vmem:[%s3 + $0x8] sm:$0xff]
      %v272 = vld [vmem:[%s3 + $0x10] sm:$0xff]
      %v273 = vld [vmem:[%s3 + $0x18] sm:$0xff]
      %vm274 = vcmask 261120
      %v276 = vsel %vm274, %v262, 0
      %v279 = vsel %vm274, %v263, 0
      %v282 = vsel %vm274, %v264, 0
      %v285 = vsel %vm274, %v265, 0
      %v288 = vsel %vm274, %v266, 0
      %v291 = vsel %vm274, %v267, 0
      %v294 = vsel %vm274, %v268, 0
      %v297 = vsel %vm274, %v269, 0
      %299 = vmatprep.subr.mxu0 0.0
      %300 = vmatpush1.msra.mxu0 %v270
      %301 = vmatprep.subr.mxu0 0.0
      %302 = vmatpush1.msra.mxu0 %v271
      %303 = vmatprep.subr.mxu0 0.0
      %304 = vmatpush1.msra.mxu0 %v272
      %305 = vmatprep.subr.mxu0 0.0
      %306 = vmatpush1.msra.mxu0 %v273
      %307 = vmatprep.subr.mxu0 0.0
      %308 = vmatpush1.msra.mxu0 0.0
      %309 = vmatprep.subr.mxu0 0.0
      %310 = vmatpush1.msra.mxu0 0.0
      %311 = vmatprep.subr.mxu0 0.0
      %312 = vmatpush1.msra.mxu0 0.0
      %313 = vmatprep.subr.mxu0 0.0
      %314 = vmatpush1.msra.mxu0 0.0
      %315 = vmatprep.subr.mxu0 0.0
      %316 = vmatpush1.msra.mxu0 0.0
      %317 = vmatprep.subr.mxu0 0.0
      %318 = vmatpush1.msra.mxu0 0.0
      %319 = vmatprep.subr.mxu0 0.0
      %320 = vmatpush1.msra.mxu0 0.0
      %321 = vmatprep.subr.mxu0 0.0
      %322 = vmatpush1.msra.mxu0 0.0
      %323 = vmatprep.subr.mxu0 0.0
      %324 = vmatpush1.msra.mxu0 0.0
      %325 = vmatprep.subr.mxu0 0.0
      %326 = vmatpush1.msra.mxu0 0.0
      %327 = vmatprep.subr.mxu0 0.0
      %328 = vmatpush1.msra.mxu0 0.0
      %329 = vmatprep.subr.mxu0 0.0
      %330 = vmatpush1.msra.mxu0 0.0
      %331 = vmatprep.subr.mxu0 0.0
      %332 = vmatpush1.msra.mxu0 0.0
      %333 = vmatprep.subr.mxu0 0.0
      %334 = vmatpush1.msra.mxu0 0.0
      %335 = vmatprep.subr.mxu0 0.0
      %336 = vmatpush1.msra.mxu0 0.0
      %337 = vmatprep.subr.mxu0 0.0
      %338 = vmatpush1.msra.mxu0 0.0
      %339 = vmatprep.subr.mxu0 0.0
      %340 = vmatpush1.msra.mxu0 0.0
      %341 = vmatprep.subr.mxu0 0.0
      %342 = vmatpush1.msra.mxu0 0.0
      %343 = vmatprep.subr.mxu0 0.0
      %344 = vmatpush1.msra.mxu0 0.0
      %345 = vmatprep.subr.mxu0 0.0
      %346 = vmatpush1.msra.mxu0 0.0
      %347 = vmatprep.subr.mxu0 0.0
      %348 = vmatpush1.msra.mxu0 0.0
      %349 = vmatprep.subr.mxu0 0.0
      %350 = vmatpush1.msra.mxu0 0.0
      %351 = vmatprep.subr.mxu0 0.0
      %352 = vmatpush1.msra.mxu0 0.0
      %353 = vmatprep.subr.mxu0 0.0
      %354 = vmatpush1.msra.mxu0 0.0
      %355 = vmatprep.subr.mxu0 0.0
      %356 = vmatpush1.msra.mxu0 0.0
      %357 = vmatprep.subr.mxu0 0.0
      %358 = vmatpush1.msra.mxu0 0.0
      %359 = vmatprep.subr.mxu0 0.0
      %360 = vmatpush1.msra.mxu0 0.0
      %361 = vmatprep.subr.mxu0 0.0
      %362 = vmatpush1.msra.mxu0 0.0
      %363 = vmatprep.mubr.f32.mxu0 0.0
      %364 = vmatmul.mubr.f32.gmra.mrb[0].mxu0 %v276
      %v365 = vpop.f32.mrb[0].mxu0
      %v366 = vadd.f32 0.0, %v365
      %v367 = vpop.f32.mrb[0].mxu0
      %368 = vmatprep.mubr.f32.mxu0 0.0
      %369 = vmatmul.mubr.f32.gmra.mrb[0].mxu0 %v279
      %v370 = vpop.f32.mrb[0].mxu0
      %v371 = vadd.f32 0.0, %v370
      %v372 = vpop.f32.mrb[0].mxu0
      %373 = vmatprep.mubr.f32.mxu0 0.0
      %374 = vmatmul.mubr.f32.gmra.mrb[0].mxu0 %v282
      %v375 = vpop.f32.mrb[0].mxu0
      %v376 = vadd.f32 0.0, %v375
      %v377 = vpop.f32.mrb[0].mxu0
      %378 = vmatprep.mubr.f32.mxu0 0.0
      %379 = vmatmul.mubr.f32.gmra.mrb[0].mxu0 %v285
      %v380 = vpop.f32.mrb[0].mxu0
      %v381 = vadd.f32 0.0, %v380
      %v382 = vpop.f32.mrb[0].mxu0
      %383 = vmatprep.mubr.f32.mxu0 0.0
      %384 = vmatmul.mubr.f32.gmra.mrb[0].mxu0 %v288
      %v385 = vpop.f32.mrb[0].mxu0
      %v386 = vadd.f32 0.0, %v385
      %v387 = vpop.f32.mrb[0].mxu0
      %388 = vmatprep.mubr.f32.mxu0 0.0
      %389 = vmatmul.mubr.f32.gmra.mrb[0].mxu0 %v291
      %v390 = vpop.f32.mrb[0].mxu0
      %v391 = vadd.f32 0.0, %v390
      %v392 = vpop.f32.mrb[0].mxu0
      %393 = vmatprep.mubr.f32.mxu0 0.0
      %394 = vmatmul.mubr.f32.gmra.mrb[0].mxu0 %v294
      %v395 = vpop.f32.mrb[0].mxu0
      %v396 = vadd.f32 0.0, %v395
      %v397 = vpop.f32.mrb[0].mxu0
      %398 = vmatprep.mubr.f32.mxu0 0.0
      %399 = vmatmul.mubr.f32.gmra.mrb[0].mxu0 %v297
      %v400 = vpop.f32.mrb[0].mxu0
      %v401 = vadd.f32 0.0, %v400
      %v402 = vpop.f32.mrb[0].mxu0
      %403 = vdwg.mxu0
      %v405 = vsel %vm274, %v250, 0
      %v408 = vsel %vm274, %v251, 0
      %v411 = vsel %vm274, %v252, 0
      %v414 = vsel %vm274, %v253, 0
      %v417 = vsel %vm274, %v254, 0
      %v420 = vsel %vm274, %v255, 0
      %v423 = vsel %vm274, %v256, 0
      %v426 = vsel %vm274, %v257, 0
      %428 = vmatprep.subr.mxu0 0.0
      %429 = vmatpush1.msra.mxu0 %v258
      %430 = vmatprep.subr.mxu0 0.0
      %431 = vmatpush1.msra.mxu0 %v259
      %432 = vmatprep.subr.mxu0 0.0
      %433 = vmatpush1.msra.mxu0 %v260
      %434 = vmatprep.subr.mxu0 0.0
      %435 = vmatpush1.msra.mxu0 %v261
      %436 = vmatprep.subr.mxu0 0.0
      %437 = vmatpush1.msra.mxu0 0.0
      %438 = vmatprep.subr.mxu0 0.0
      %439 = vmatpush1.msra.mxu0 0.0
      %440 = vmatprep.subr.mxu0 0.0
      %441 = vmatpush1.msra.mxu0 0.0
      %442 = vmatprep.subr.mxu0 0.0
      %443 = vmatpush1.msra.mxu0 0.0
      %444 = vmatprep.subr.mxu0 0.0
      %445 = vmatpush1.msra.mxu0 0.0
      %446 = vmatprep.subr.mxu0 0.0
      %447 = vmatpush1.msra.mxu0 0.0
      %448 = vmatprep.subr.mxu0 0.0
      %449 = vmatpush1.msra.mxu0 0.0
      %450 = vmatprep.subr.mxu0 0.0
      %451 = vmatpush1.msra.mxu0 0.0
      %452 = vmatprep.subr.mxu0 0.0
      %453 = vmatpush1.msra.mxu0 0.0
      %454 = vmatprep.subr.mxu0 0.0
      %455 = vmatpush1.msra.mxu0 0.0
      %456 = vmatprep.subr.mxu0 0.0
      %457 = vmatpush1.msra.mxu0 0.0
      %458 = vmatprep.subr.mxu0 0.0
      %459 = vmatpush1.msra.mxu0 0.0
      %460 = vmatprep.subr.mxu0 0.0
      %461 = vmatpush1.msra.mxu0 0.0
      %462 = vmatprep.subr.mxu0 0.0
      %463 = vmatpush1.msra.mxu0 0.0
      %464 = vmatprep.subr.mxu0 0.0
      %465 = vmatpush1.msra.mxu0 0.0
      %466 = vmatprep.subr.mxu0 0.0
      %467 = vmatpush1.msra.mxu0 0.0
      %468 = vmatprep.subr.mxu0 0.0
      %469 = vmatpush1.msra.mxu0 0.0
      %470 = vmatprep.subr.mxu0 0.0
      %471 = vmatpush1.msra.mxu0 0.0
      %472 = vmatprep.subr.mxu0 0.0
      %473 = vmatpush1.msra.mxu0 0.0
      %474 = vmatprep.subr.mxu0 0.0
      %475 = vmatpush1.msra.mxu0 0.0
      %476 = vmatprep.subr.mxu0 0.0
      %477 = vmatpush1.msra.mxu0 0.0
      %478 = vmatprep.subr.mxu0 0.0
      %479 = vmatpush1.msra.mxu0 0.0
      %480 = vmatprep.subr.mxu0 0.0
      %481 = vmatpush1.msra.mxu0 0.0
      %482 = vmatprep.subr.mxu0 0.0
      %483 = vmatpush1.msra.mxu0 0.0
      %484 = vmatprep.subr.mxu0 0.0
      %485 = vmatpush1.msra.mxu0 0.0
      %486 = vmatprep.subr.mxu0 0.0
      %487 = vmatpush1.msra.mxu0 0.0
      %488 = vmatprep.subr.mxu0 0.0
      %489 = vmatpush1.msra.mxu0 0.0
      %490 = vmatprep.subr.mxu0 0.0
      %491 = vmatpush1.msra.mxu0 0.0
      %492 = vmatprep.mubr.f32.mxu0 0.0
      %493 = vmatmul.mubr.f32.gmra.mrb[0].mxu0 %v405
      %v494 = vpop.f32.mrb[0].mxu0
      %v495 = vadd.f32 %v366, %v494
      %v496 = vpop.f32.mrb[0].mxu0
      %497 = vmatprep.mubr.f32.mxu0 0.0
      %498 = vmatmul.mubr.f32.gmra.mrb[0].mxu0 %v408
      %v499 = vpop.f32.mrb[0].mxu0
      %v500 = vadd.f32 %v371, %v499
      %v501 = vpop.f32.mrb[0].mxu0
      %502 = vmatprep.mubr.f32.mxu0 0.0
      %503 = vmatmul.mubr.f32.gmra.mrb[0].mxu0 %v411
      %v504 = vpop.f32.mrb[0].mxu0
      %v505 = vadd.f32 %v376, %v504
      %v506 = vpop.f32.mrb[0].mxu0
      %507 = vmatprep.mubr.f32.mxu0 0.0
      %508 = vmatmul.mubr.f32.gmra.mrb[0].mxu0 %v414
      %v509 = vpop.f32.mrb[0].mxu0
      %v510 = vadd.f32 %v381, %v509
      %v511 = vpop.f32.mrb[0].mxu0
      %512 = vmatprep.mubr.f32.mxu0 0.0
      %513 = vmatmul.mubr.f32.gmra.mrb[0].mxu0 %v417
      %v514 = vpop.f32.mrb[0].mxu0
      %v515 = vadd.f32 %v386, %v514
      %v516 = vpop.f32.mrb[0].mxu0
      %517 = vmatprep.mubr.f32.mxu0 0.0
      %518 = vmatmul.mubr.f32.gmra.mrb[0].mxu0 %v420
      %v519 = vpop.f32.mrb[0].mxu0
      %v520 = vadd.f32 %v391, %v519
      %v521 = vpop.f32.mrb[0].mxu0
      %522 = vmatprep.mubr.f32.mxu0 0.0
      %523 = vmatmul.mubr.f32.gmra.mrb[0].mxu0 %v423
      %v524 = vpop.f32.mrb[0].mxu0
      %v525 = vadd.f32 %v396, %v524
      %v526 = vpop.f32.mrb[0].mxu0
      %527 = vmatprep.mubr.f32.mxu0 0.0
      %528 = vmatmul.mubr.f32.gmra.mrb[0].mxu0 %v426
      %v529 = vpop.f32.mrb[0].mxu0
      %v530 = vadd.f32 %v401, %v529
      %v531 = vpop.f32.mrb[0].mxu0
      %532 = vdwg.mxu0
      %v533 = vld [vmem:[%s4] sm:$0x1]
      %v535 = vlaneseq
      %v536 = vshrl.u32 %v535, 7
      %v537 = vsub.s32 0, %v536
      %v538 = vrot.slane %v533, %v537
      %v540 = vadd.f32 %v495, %v538
      %v541 = vadd.f32 %v500, %v538
      %v542 = vadd.f32 %v505, %v538
      %v543 = vadd.f32 %v510, %v538
      %v544 = vadd.f32 %v515, %v538
      %v545 = vadd.f32 %v520, %v538
      %v546 = vadd.f32 %v525, %v538
      %v547 = vadd.f32 %v530, %v538
      %v548 = vmul.f32 %v540, %v540
      %v549 = vmul.f32 %v541, %v541
      %v550 = vmul.f32 %v542, %v542
      %v551 = vmul.f32 %v543, %v543
      %v552 = vmul.f32 %v544, %v544
      %v553 = vmul.f32 %v545, %v545
      %v554 = vmul.f32 %v546, %v546
      %v555 = vmul.f32 %v547, %v547
      %556 = vadd.xlane.f32.xlu0 %v548
      %v557 = vpop.xlane.xlu0 %556
      %558 = vadd.xlane.f32.xlu0 %v549
      %v559 = vpop.xlane.xlu0 %558
      %560 = vadd.xlane.f32.xlu0 %v550
      %v561 = vpop.xlane.xlu0 %560
      %562 = vadd.xlane.f32.xlu0 %v551
      %v563 = vpop.xlane.xlu0 %562
      %564 = vadd.xlane.f32.xlu0 %v552
      %v565 = vpop.xlane.xlu0 %564
      %566 = vadd.xlane.f32.xlu0 %v553
      %v567 = vpop.xlane.xlu0 %566
      %568 = vadd.xlane.f32.xlu0 %v554
      %v569 = vpop.xlane.xlu0 %568
      %570 = vadd.xlane.f32.xlu0 %v555
      %v571 = vpop.xlane.xlu0 %570
      %v572 = vmax.f32 %v557, 1e-24
      %v573 = vmax.f32 %v559, 1e-24
      %v574 = vmax.f32 %v561, 1e-24
      %v575 = vmax.f32 %v563, 1e-24
      %v576 = vmax.f32 %v565, 1e-24
      %v577 = vmax.f32 %v567, 1e-24
      %v578 = vmax.f32 %v569, 1e-24
      %v579 = vmax.f32 %v571, 1e-24
      %v580 = vrsqrt.pop %v572
      %v581 = vrsqrt.pop %v573
      %v582 = vrsqrt.pop %v574
      %v583 = vrsqrt.pop %v575
      %v584 = vrsqrt.pop %v576
      %v585 = vrsqrt.pop %v577
      %v586 = vrsqrt.pop %v578
      %v587 = vrsqrt.pop %v579
      %v588 = vmul.f32 %v540, %v580
      %v589 = vmul.f32 %v541, %v581
      %v590 = vmul.f32 %v542, %v582
      %v591 = vmul.f32 %v543, %v583
      %v592 = vmul.f32 %v544, %v584
      %v593 = vmul.f32 %v545, %v585
      %v594 = vmul.f32 %v546, %v586
      %v595 = vmul.f32 %v547, %v587
      %v596 = vmax.f32 %v588, 0.0
      %v597 = vmax.f32 %v589, 0.0
      %v598 = vmax.f32 %v590, 0.0
      %v599 = vmax.f32 %v591, 0.0
      %v600 = vmax.f32 %v592, 0.0
      %v601 = vmax.f32 %v593, 0.0
      %v602 = vmax.f32 %v594, 0.0
      %v603 = vmax.f32 %v595, 0.0
      %604 = vst [vmem:[%s248] sm:$0xff] %v596
      %605 = vst [vmem:[%s248 + $0x8] sm:$0xff] %v597
      %606 = vst [vmem:[%s248 + $0x10] sm:$0xff] %v598
      %607 = vst [vmem:[%s248 + $0x18] sm:$0xff] %v599
      %608 = vst [vmem:[%s248 + $0x20] sm:$0xff] %v600
      %609 = vst [vmem:[%s248 + $0x28] sm:$0xff] %v601
      %610 = vst [vmem:[%s248 + $0x30] sm:$0xff] %v602
      %611 = vst [vmem:[%s248 + $0x38] sm:$0xff] %v603
      %s612 = smul.u32 8, %s16
      %p613 = scmp.lt.s32.totalorder %s612, 15
      %s614 = scalar_select %p613, %s612, 15
      %s615 = smul.addr %s614, 8
      %s616 = scalar_lea.vmem %s5, %s615
      // Predicated region
      $region41: #{bundler_forward.1} parent=39 // pred_check
        %p617 = pneg %p149
      $region42: #{bundler_forward.1} parent=39 // pred_check_branch
        %619 = sbr.rel (%p617) target = $region44
      $region43: #{bundler_forward.1} parent=39 // pred_region
        %s620 = smul.u32 8, %s16
      $region44: #{bundler_forward.1} parent=39 // pred_fallthru
        _
    $region40: #{bundler_forward.1} parent=5 // pred_fallthru
      _
    %p621 = scmp.le.s32.totalorder 2, %s11
    // Predicated region
    $region45: #{bundler_forward.1} parent=5 // pred_check
      %p622 = pneg %p621
    $region46: #{bundler_forward.1} parent=5 // pred_check_branch
      %624 = sbr.rel (%p622) target = $region48
    $region47: #{bundler_forward.1} parent=5 // pred_region
      %s625 = ssub.s32 %s11, 2
      // Predicated region
      $region49: #{bundler_forward.1} parent=47 // pred_check
        %p626 = pneg %p155
      $region50: #{bundler_forward.1} parent=47 // pred_check_branch
        %628 = sbr.rel (%p626) target = $region52
      $region51: #{bundler_forward.1} parent=47 // pred_region
        %s629 = smul.u32 8, %s17
        %p630 = scmp.lt.s32.totalorder %s629, 15
        %s631 = scalar_select %p630, %s629, 15
        %s632 = smul.addr %s631, 8
        %s633 = scalar_lea.vmem %s5, %s632
      $region52: #{bundler_forward.1} parent=47 // pred_fallthru
        _
    $region48: #{bundler_forward.1} parent=5 // pred_fallthru
      _
  $region6: #{bundler_forward.1} parent=0 // loop_footer
    %s15 = sadd.s32 1, %s11
  $region7: #{bundler_forward.1} parent=0 // loop_footer_branch
    %10 = sbr.rel target = $region3
  $region8: #{bundler_forward.1} parent=0 // loop_exit
    _

</llo_original>
